<compile_context>
chip_gen: v5e
topology: v5e:2x2
jax: 0.10.0
libtpu: 0.0.40
codegen_flags: <defaults>
</compile_context>

<pallas_src>
import jax
import jax.numpy as jnp
from jax.experimental import pallas as pl
from jax.experimental.pallas import tpu as pltpu


def _round_up(x: int, m: int) -> int:
    return pl.cdiv(x, m) * m


def _gmf_kernel(user_ref, item_ref, out_ref):
    """One batch tile.  user_ref/item_ref: (D, TB); out_ref: (1, TB)."""
    # Cast to f32 for the VPU math (v5e has no bf16 VPU path); products and the
    # accumulation are exact in f32 given the stored embedding values.
    u = user_ref[...].astype(jnp.float32)
    v = item_ref[...].astype(jnp.float32)
    prod = u * v                                    # VPU, full 128-lane occupancy

    # Exact f32 per-sample reduction over the embedding dim (sublane axis).
    # Lowers to a handful of full-vreg adds + an intra-vreg XLU sublane tree;
    # no MXU involvement, so the compute chain stays hidden under the DMA.
    s = jnp.sum(prod, axis=0, keepdims=True)        # (1, TB), lane-dense

    # Sigmoid via exp (EUP) + exact divide; lane-dense so the store is unmasked.
    out_ref[...] = (1.0 / (1.0 + jnp.exp(-s))).astype(out_ref.dtype)


def gmf_forward(user_idx, item_idx, user_table, item_table, *,
                batch_tile: int = 16384, emb_dtype=jnp.bfloat16):
    """GMF forward: sigmoid(sum(U[user] * V[item], axis=-1)).

    user_idx/item_idx: (B,) int32; tables: (n_users, D) / (n_items, D) float32.
    emb_dtype: storage dtype of the gathered embedding streams (bf16 default,
    float32 for exact numerics).  Returns (B,) float32.
    """
    B = int(user_idx.shape[0])
    D = int(user_table.shape[1])

    # Samples per grid step: multiple of 128 (lane-dense output / 128-aligned
    # input minor dim), no larger than the padded batch.
    tb = min(int(batch_tile), _round_up(B, 128))
    tb = max(128, (tb // 128) * 128)
    B_pad = _round_up(B, tb)
    num_tiles = B_pad // tb  # keep >=2 (and even) when possible for v7x megacore

    # Pad the *indices* (row 0 of each table is a valid row); padded samples
    # are cropped from the output.
    if B_pad != B:
        user_idx = jnp.pad(user_idx, (0, B_pad - B))
        item_idx = jnp.pad(item_idx, (0, B_pad - B))

    # Glue: embedding lookup stays in XLA (see TODO above).  Gather from the
    # transposed (D, n) tables so the streams arrive in (D, B) layout already,
    # stored as emb_dtype (bf16 by default) to halve the dominant HBM traffic.
    user_t = jnp.asarray(user_table, dtype=emb_dtype).T        # (D, n_users), tiny
    item_t = jnp.asarray(item_table, dtype=emb_dtype).T        # (D, n_items), tiny
    user_emb = jnp.take(user_t, user_idx, axis=1)              # (D, B_pad)
    item_emb = jnp.take(item_t, item_idx, axis=1)              # (D, B_pad)

    # VMEM budget: 2 operands x 2 pipeline buffers x input block, 2 output
    # blocks, plus f32 intermediates (u, v, prod), 2x headroom, capped at
    # 48 MiB so we never claim all of v7x's 64 MiB per-TensorCore VMEM.
    in_block = D * tb * jnp.dtype(emb_dtype).itemsize
    out_block = tb * 4
    f32_tmp = 3 * D * tb * 4
    vmem_limit = int(min(max(2 * (4 * in_block + 2 * out_block + f32_tmp),
                             8 << 20), 48 << 20))

    out = pl.pallas_call(
        _gmf_kernel,
        out_shape=jax.ShapeDtypeStruct((1, B_pad), jnp.float32),
        grid_spec=pltpu.PrefetchScalarGridSpec(
            num_scalar_prefetch=0,
            grid=(num_tiles,),
            in_specs=[
                pl.BlockSpec((D, tb), lambda b: (0, b)),
                pl.BlockSpec((D, tb), lambda b: (0, b)),
            ],
            out_specs=pl.BlockSpec((1, tb), lambda b: (0, b)),
        ),
        compiler_params=pltpu.CompilerParams(
            dimension_semantics=("parallel",),   # independent batch tiles -> megacore
            vmem_limit_bytes=vmem_limit,
        ),
    )(user_emb, item_emb)

    # (1, B_pad) minor dim is sample order; crop the padded tail.
    return out.reshape(B_pad)[:B]


if __name__ == "__main__":
    # Deterministic synthetic parameters (module __init__ shapes):
    #   user_embedding: (n_users, dim), item_embedding: (n_items, dim)
    n_users, n_items, dim = 64, 48, 32
    batch = 250  # deliberately NOT a multiple of the tile: exercises padding + crop

    key = jax.random.PRNGKey(0)
    k_u, k_i, k_uidx, k_iidx = jax.random.split(key, 4)

    user_table = jax.random.normal(k_u, (n_users, dim), dtype=jnp.float32) * 0.1
    item_table = jax.random.normal(k_i, (n_items, dim), dtype=jnp.float32) * 0.1

    user_idx = jax.random.randint(k_uidx, (batch,), 0, n_users, dtype=jnp.int32)
    item_idx = jax.random.randint(k_iidx, (batch,), 0, n_items, dtype=jnp.int32)

    # Small batch_tile for the demo so the grid has 2 (even) steps and both v7x
    # TensorCores get work; the production default is 16384 samples per step.
    out = gmf_forward(user_idx, item_idx, user_table, item_table, batch_tile=128)
    out = jax.block_until_ready(out)
    assert out.shape == (batch,)

    # Pure-JAX references.
    u = jnp.take(user_table, user_idx, axis=0)
    v = jnp.take(item_table, item_idx, axis=0)
    ref_exact = jax.nn.sigmoid(jnp.sum(u * v, axis=-1))
    ub = u.astype(jnp.bfloat16).astype(jnp.float32)
    vb = v.astype(jnp.bfloat16).astype(jnp.float32)
    ref_bf16 = jax.nn.sigmoid(jnp.sum(ub * vb, axis=-1))

    # The kernel math is exact f32 over bf16-stored embeddings: tight match to
    # the bf16-storage reference, and within bf16 rounding of the exact one.
    assert jnp.allclose(out, ref_bf16, atol=1e-4, rtol=1e-4), (out, ref_bf16)
    assert jnp.allclose(out, ref_exact, atol=2e-3, rtol=2e-3), (out, ref_exact)
    print("KERNEL_OK")
</pallas_src>

<mosaic_0001>
module attributes {stable_mosaic.version = 11 : i64} {
  func.func @_gmf_kernel(%arg0: i32, %arg1: memref<32x128xbf16, #tpu.memory_space<vmem>>, %arg2: memref<32x128xbf16, #tpu.memory_space<vmem>>, %arg3: memref<1x128xf32, #tpu.memory_space<vmem>>) attributes {dimension_semantics = [#tpu.dimension_semantics<parallel>], iteration_bounds = array<i64: 2>, scalar_prefetch = 0 : i64, scratch_operands = 0 : i64, tpu.core_type = #tpu.core_type<tc>, window_params = [{transform_indices = @transform_0, window_bounds = array<i64: 32, 128>}, {transform_indices = @transform_1, window_bounds = array<i64: 32, 128>}, {transform_indices = @transform_2, window_bounds = array<i64: 1, 128>}]} {
    %c0 = arith.constant 0 : index
    %c0_0 = arith.constant 0 : index
    %0 = vector.load %arg1[%c0, %c0_0] : memref<32x128xbf16, #tpu.memory_space<vmem>>, vector<32x128xbf16>
    %1 = arith.extf %0 : vector<32x128xbf16> to vector<32x128xf32>
    %c0_1 = arith.constant 0 : index
    %c0_2 = arith.constant 0 : index
    %2 = vector.load %arg2[%c0_1, %c0_2] : memref<32x128xbf16, #tpu.memory_space<vmem>>, vector<32x128xbf16>
    %3 = arith.extf %2 : vector<32x128xbf16> to vector<32x128xf32>
    %4 = arith.mulf %1, %3 : vector<32x128xf32>
    %cst = arith.constant dense<0.000000e+00> : vector<128xf32>
    %5 = vector.multi_reduction <add>, %4, %cst [0] : vector<32x128xf32> to vector<128xf32>
    %6 = vector.shape_cast %5 : vector<128xf32> to vector<1x128xf32>
    %cst_3 = arith.constant 0.000000e+00 : f32
    %7 = vector.broadcast %cst_3 : f32 to vector<1x128xf32>
    %8 = arith.subf %7, %6 : vector<1x128xf32>
    %9 = math.exp %8 : vector<1x128xf32>
    %cst_4 = arith.constant 1.000000e+00 : f32
    %10 = vector.broadcast %cst_4 : f32 to vector<1x128xf32>
    %11 = arith.addf %10, %9 : vector<1x128xf32>
    %cst_5 = arith.constant 1.000000e+00 : f32
    %12 = vector.broadcast %cst_5 : f32 to vector<1x128xf32>
    %13 = arith.divf %12, %11 : vector<1x128xf32>
    %c0_6 = arith.constant 0 : index
    %c0_7 = arith.constant 0 : index
    %14 = vector.load %arg3[%c0_6, %c0_7] : memref<1x128xf32, #tpu.memory_space<vmem>>, vector<1x128xf32>
    tpu.vector_store %arg3[%c0_6, %c0_7], %13 {strides = array<i32>} : memref<1x128xf32, #tpu.memory_space<vmem>>, vector<1x128xf32>,
    return
  }
  func.func @transform_0(%arg0: i32) -> (i32, i32) {
    %c0_i32 = arith.constant 0 : i32
    %c0_i32_0 = arith.constant 0 : i32
    return %c0_i32, %arg0 : i32, i32
  }
  func.func @transform_1(%arg0: i32) -> (i32, i32) {
    %c0_i32 = arith.constant 0 : i32
    %c0_i32_0 = arith.constant 0 : i32
    return %c0_i32, %arg0 : i32, i32
  }
  func.func @transform_2(%arg0: i32) -> (i32, i32) {
    %c0_i32 = arith.constant 0 : i32
    %c0_i32_0 = arith.constant 0 : i32
    return %c0_i32, %arg0 : i32, i32
  }
}

</mosaic_0001>

<llo_original>
// kernel: tpu_custom_call.1
$region0: #{tpu_custom_call.1}
  #allocation0 [shape = 'u32[]', space=smem, size = 0x4, offset = 0x4, fixed_abs, tag = 'smem constant byte address 0x4 - core index']
  #allocation1 [shape = 'u32[72,128]{1,0:T(1,128)}', space=vmem, size = 0x9000, scoped, tag = 'internal scratch']
  %s0 = inlined_call_operand.hbm [shape: bf16[32,256], index: 0, kind: input, shape index: {}]
  %s1 = inlined_call_operand.hbm [shape: bf16[32,256], index: 1, kind: input, shape index: {}]
  %s2 = inlined_call_operand.hbm [shape: f32[1,256], index: 2, kind: output, shape index: {}]
  %s3 = sld [smem:[#allocation0]]
  $region49: #{tpu_custom_call.1} parent=0
    _
  %s5 = ssub.s32 1, %s3
  %s6 = scalar_select 0, %s5, %s3
  $region1: #{tpu_custom_call.1} parent=0
    #allocation2 [shape = 'u8[16384]{0}', space=vmem, size = 0x4000, scoped, tag = 'input window, operand 0']
    #allocation3 [shape = 's32[2]{0}', space=sflag, size = 0x8, scoped, tag = 'scoped memory for tpu_custom_call.1']
    #allocation4 [shape = 's32[2]{0}', space=sflag, size = 0x8, scoped, tag = 'scoped memory for tpu_custom_call.1']
    #allocation5 [shape = 'u8[16384]{0}', space=vmem, size = 0x4000, scoped, tag = 'input window, operand 1']
    #allocation6 [shape = 's32[2]{0}', space=sflag, size = 0x8, scoped, tag = 'scoped memory for tpu_custom_call.1']
    #allocation7 [shape = 'u8[1024]{0}', space=vmem, size = 0x400, scoped, tag = 'output window, operand 0']
    %7 = vsyncpa [#allocation3], 0
    %s8 = scalar_lea.sflag [#allocation3], 1
    %9 = vsyncpa %s8, 0
    %10 = vsyncpa [#allocation6], 0
    %s11 = scalar_lea.sflag [#allocation6], 1
    %12 = vsyncpa %s11, 0
    %13 = vsyncpa [#allocation4], 0
    %s14 = scalar_lea.sflag [#allocation4], 1
    %15 = vsyncpa %s14, 0
    loop: start=0, step=1, limit=4
    $region2: #{tpu_custom_call.1} parent=1 // loop_pre_header
      _
    $region3: #{tpu_custom_call.1} parent=1 // loop_header
      %s17 = sphi 0, %s21
      %p18 = scmp.ge.s32.totalorder %s17, 4
      %s27 = sphi 0, %s29
      %s30 = sphi 0, %s27
      %s31 = sphi 0, %s30
      %s47 = sphi 0, %s31
      %s53 = sphi 0, %s55
      %s56 = sphi 0, %s53
      %s57 = sphi 0, %s56
      %s73 = sphi 0, %s57
      %s79 = sphi 0, %s81
      %s82 = sphi 0, %s79
      %s83 = sphi 0, %s82
      %s99 = sphi 0, %s83
    $region4: #{tpu_custom_call.1} parent=1 // loop_header_branch
      %20 = sbr.rel (%p18) target = $region8
    $region5: #{tpu_custom_call.1} parent=1 // loop_body
      %s22 = ssub.s32 %s17, 1
      %s23 = ssub.s32 %s17, 2
      %s24 = sadd.s32 %s17, 1
      %s25 = ssub.s32 %s17, %s24
      %p26 = scmp.eq.s32.totalorder %s25, 0
      %s28 = sadd.s32 %s27, 1
      %s29 = scalar_select %p26, %s27, %s28
      %p32 = pneg %p26
      %p33 = scmp.eq.s32.totalorder %s17, 1
      %p34 = por %p32, %p33
      %p35 = scmp.ne.s32.totalorder %s27, %s30
      %p36 = scmp.eq.s32.totalorder %s17, 0
      %p37 = por %p35, %p36
      %p38 = scmp.ne.s32.totalorder %s27, %s30
      %p39 = scmp.eq.s32.totalorder %s22, 1
      %p40 = por %p38, %p39
      %p41 = scmp.ne.s32.totalorder %s30, %s31
      %p42 = scmp.eq.s32.totalorder %s22, 0
      %p43 = por %p41, %p42
      %p44 = scmp.ne.s32.totalorder %s30, %s31
      %p45 = scmp.eq.s32.totalorder %s23, 1
      %p46 = por %p44, %p45
      %p48 = scmp.ne.s32.totalorder %s31, %s47
      %p49 = scmp.eq.s32.totalorder %s23, 0
      %p50 = por %p48, %p49
      %s51 = ssub.s32 %s17, %s24
      %p52 = scmp.eq.s32.totalorder %s51, 0
      %s54 = sadd.s32 %s53, 1
      %s55 = scalar_select %p52, %s53, %s54
      %p58 = pneg %p52
      %p59 = scmp.eq.s32.totalorder %s17, 1
      %p60 = por %p58, %p59
      %p61 = scmp.ne.s32.totalorder %s53, %s56
      %p62 = scmp.eq.s32.totalorder %s17, 0
      %p63 = por %p61, %p62
      %p64 = scmp.ne.s32.totalorder %s53, %s56
      %p65 = scmp.eq.s32.totalorder %s22, 1
      %p66 = por %p64, %p65
      %p67 = scmp.ne.s32.totalorder %s56, %s57
      %p68 = scmp.eq.s32.totalorder %s22, 0
      %p69 = por %p67, %p68
      %p70 = scmp.ne.s32.totalorder %s56, %s57
      %p71 = scmp.eq.s32.totalorder %s23, 1
      %p72 = por %p70, %p71
      %p74 = scmp.ne.s32.totalorder %s57, %s73
      %p75 = scmp.eq.s32.totalorder %s23, 0
      %p76 = por %p74, %p75
      %s77 = ssub.s32 %s17, %s24
      %p78 = scmp.eq.s32.totalorder %s77, 0
      %s80 = sadd.s32 %s79, 1
      %s81 = scalar_select %p78, %s79, %s80
      %p84 = pneg %p78
      %p85 = scmp.eq.s32.totalorder %s17, 1
      %p86 = por %p84, %p85
      %p87 = scmp.ne.s32.totalorder %s79, %s82
      %p88 = scmp.eq.s32.totalorder %s17, 0
      %p89 = por %p87, %p88
      %p90 = scmp.ne.s32.totalorder %s79, %s82
      %p91 = scmp.eq.s32.totalorder %s22, 1
      %p92 = por %p90, %p91
      %p93 = scmp.ne.s32.totalorder %s82, %s83
      %p94 = scmp.eq.s32.totalorder %s22, 0
      %p95 = por %p93, %p94
      %p96 = scmp.ne.s32.totalorder %s82, %s83
      %p97 = scmp.eq.s32.totalorder %s23, 1
      %p98 = por %p96, %p97
      %p100 = scmp.ne.s32.totalorder %s83, %s99
      %p101 = scmp.eq.s32.totalorder %s23, 0
      %p102 = por %p100, %p101
      %p103 = scmp.le.s32.totalorder 1, %s17
      %p104 = scmp.lt.s32.totalorder %s17, 3
      %p105 = pnand %p103, %p104
      %p106 = pneg %p105
      // Predicated region
      $region9: #{tpu_custom_call.1} parent=5 // pred_check
        _
      $region10: #{tpu_custom_call.1} parent=5 // pred_check_branch
        %108 = sbr.rel (%p105) target = $region12
      $region11: #{tpu_custom_call.1} parent=5 // pred_region
        %s109 = ssub.s32 %s17, 1
      $region12: #{tpu_custom_call.1} parent=5 // pred_fallthru
        _
      %p110 = scmp.lt.s32.totalorder %s17, 2
      // Predicated region
      $region13: #{tpu_custom_call.1} parent=5 // pred_check
        %p111 = pneg %p110
      $region14: #{tpu_custom_call.1} parent=5 // pred_check_branch
        %113 = sbr.rel (%p111) target = $region16
      $region15: #{tpu_custom_call.1} parent=5 // pred_region
        // Predicated region
        $region17: #{tpu_custom_call.1} parent=15 // pred_check
          %p114 = pneg %p37
        $region18: #{tpu_custom_call.1} parent=15 // pred_check_branch
          %116 = sbr.rel (%p114) target = $region20
        $region19: #{tpu_custom_call.1} parent=15 // pred_region
          %s117 = sand.u32 %s27, 1
          %s118 = scalar_lea.sflag [#allocation3], %s117
          %s119 = sand.u32 %s27, 1
          %s120 = smul.addr %s119, 16
          %s121 = scalar_lea.vmem [#allocation2], %s120
          %123 = vsyncadd %s118, 0
          %s124 = smul.addr %s17, 4
          %s125 = scalar_lea.hbm %s0, %s124
          %s126 = sshll.u32 %s125, 4
          %s127 = int_to_ptr.hbm [resolvable:$true] %s126
          %s128 = sshll.u32 %s121, 4
          %s129 = int_to_ptr.vmem [resolvable:$true] %s128
          %134 = dma.hbm_to_vmem [thread:$0]  %s127, 256, %s129, %s118, 128, 64, 4
        $region20: #{tpu_custom_call.1} parent=15 // pred_fallthru
          _
        // Predicated region
        $region21: #{tpu_custom_call.1} parent=15 // pred_check
          %p135 = pneg %p63
        $region22: #{tpu_custom_call.1} parent=15 // pred_check_branch
          %137 = sbr.rel (%p135) target = $region24
        $region23: #{tpu_custom_call.1} parent=15 // pred_region
          %s138 = sand.u32 %s53, 1
          %s139 = scalar_lea.sflag [#allocation6], %s138
          %s140 = sand.u32 %s53, 1
          %s141 = smul.addr %s140, 16
          %s142 = scalar_lea.vmem [#allocation5], %s141
          %144 = vsyncadd %s139, 0
          %s145 = smul.addr %s17, 4
          %s146 = scalar_lea.hbm %s1, %s145
          %s147 = sshll.u32 %s146, 4
          %s148 = int_to_ptr.hbm [resolvable:$true] %s147
          %s149 = sshll.u32 %s142, 4
          %s150 = int_to_ptr.vmem [resolvable:$true] %s149
          %155 = dma.hbm_to_vmem [thread:$0]  %s148, 256, %s150, %s139, 128, 64, 4
        $region24: #{tpu_custom_call.1} parent=15 // pred_fallthru
          _
      $region16: #{tpu_custom_call.1} parent=5 // pred_fallthru
        _
      %p156 = scmp.le.s32.totalorder 1, %s17
      %p157 = scmp.lt.s32.totalorder %s17, 3
      %p158 = pnand %p156, %p157
      %p159 = pneg %p158
      // Predicated region
      $region25: #{tpu_custom_call.1} parent=5 // pred_check
        _
      $region26: #{tpu_custom_call.1} parent=5 // pred_check_branch
        %161 = sbr.rel (%p158) target = $region28
      $region27: #{tpu_custom_call.1} parent=5 // pred_region
        %s162 = ssub.s32 %s17, 1
        %s163 = sand.u32 %s30, 1
        %s164 = scalar_lea.sflag [#allocation3], %s163
        %s165 = sand.u32 %s30, 1
        %s166 = smul.addr %s165, 16
        %s167 = scalar_lea.vmem [#allocation2], %s166
        // Predicated region
        $region29: #{tpu_custom_call.1} parent=27 // pred_check
          %p168 = pneg %p43
        $region30: #{tpu_custom_call.1} parent=27 // pred_check_branch
          %170 = sbr.rel (%p168) target = $region32
        $region31: #{tpu_custom_call.1} parent=27 // pred_region
          %172 = dma.done %s164, 256
        $region32: #{tpu_custom_call.1} parent=27 // pred_fallthru
          _
        %s173 = sand.u32 %s56, 1
        %s174 = scalar_lea.sflag [#allocation6], %s173
        %s175 = sand.u32 %s56, 1
        %s176 = smul.addr %s175, 16
        %s177 = scalar_lea.vmem [#allocation5], %s176
        // Predicated region
        $region33: #{tpu_custom_call.1} parent=27 // pred_check
          %p178 = pneg %p69
        $region34: #{tpu_custom_call.1} parent=27 // pred_check_branch
          %180 = sbr.rel (%p178) target = $region36
        $region35: #{tpu_custom_call.1} parent=27 // pred_region
          %182 = dma.done %s174, 256
        $region36: #{tpu_custom_call.1} parent=27 // pred_fallthru
          _
        %s183 = sand.u32 %s30, 1
        %s184 = scalar_lea.sflag [#allocation3], %s183
        %s185 = sand.u32 %s30, 1
        %s186 = smul.addr %s185, 16
        %s187 = scalar_lea.vmem [#allocation2], %s186
        %p188 = pneg %p43
        %p189 = pneg %p40
        %s190 = sand.u32 %s56, 1
        %s191 = scalar_lea.sflag [#allocation6], %s190
        %s192 = sand.u32 %s56, 1
        %s193 = smul.addr %s192, 16
        %s194 = scalar_lea.vmem [#allocation5], %s193
        %p195 = pneg %p69
        %p196 = pneg %p66
        %p197 = pneg %p95
        %p198 = pneg %p92
        %s199 = sand.u32 %s82, 1
        %s200 = scalar_lea.sflag [#allocation4], %s199
        %s201 = sand.u32 %s82, 1
        %s202 = scalar_lea.vmem [#allocation7], %s201
        %v203 = vld [vmem:[%s167] sm:$0xf]
        %v204 = vld [vmem:[%s167 + $0x4] sm:$0xf]
        %v205 = vld [vmem:[%s167 + $0x8] sm:$0xf]
        %v206 = vld [vmem:[%s167 + $0xc] sm:$0xf]
        %v207 = vunpack.c.l.bf16 %v203
        %v208 = vunpack.c.l.bf16 %v204
        %v209 = vunpack.c.l.bf16 %v205
        %v210 = vunpack.c.l.bf16 %v206
        %v211 = vld [vmem:[%s177] sm:$0xf]
        %v212 = vld [vmem:[%s177 + $0x4] sm:$0xf]
        %v213 = vld [vmem:[%s177 + $0x8] sm:$0xf]
        %v214 = vld [vmem:[%s177 + $0xc] sm:$0xf]
        %v215 = vunpack.c.l.bf16 %v211
        %v216 = vunpack.c.l.bf16 %v212
        %v217 = vunpack.c.l.bf16 %v213
        %v218 = vunpack.c.l.bf16 %v214
        %v219 = vmul.f32 %v207, %v215
        %v220 = vmul.f32 %v208, %v216
        %v221 = vmul.f32 %v209, %v217
        %v222 = vmul.f32 %v210, %v218
        %v223 = vadd.f32 %v219, %v220
        %v224 = vadd.f32 %v223, %v221
        %v225 = vadd.f32 %v224, %v222
        %v226 = vrot.slane %v225, 4
        %v227 = vadd.f32 %v225, %v226
        %v228 = vrot.slane %v227, 2
        %v229 = vadd.f32 %v227, %v228
        %v230 = vrot.slane %v229, 1
        %v231 = vadd.f32 %v229, %v230
        %v232 = vsub.f32 0.0, %v231
        %v233 = vmul.f32 %v232, 1.442695
        %v234 = vpow.pop %v233
        %v235 = vadd.f32 %v234, 1.0
        %v236 = vrcp.pop %v235
        %v237 = vmul.f32 %v235, %v236
        %v238 = vsub.f32 1.0, %v237
        %v239 = vmul.f32 %v236, %v238
        %v240 = vadd.f32 %v236, %v239
        %vm241 = vweird.f32 %v235
        %vm242 = vweird.f32 %v236
        %vm243 = vmor %vm241, %vm242
        %v244 = vsel %vm243, %v236, %v240
        %v245 = vand.u32 2147483647, %v235
        %vm246 = vcmp.eq.f32.partialorder %v245, 8.507059e+37
        %v247 = vand.u32 %v235, 2147483648
        %v248 = vor.u32 1.1754944e-38, %v247
        %v249 = vsel %vm246, %v248, %v244
        %v250 = vmul.f32 1.0, %v249
        %251 = vst [vmem:[%s202] sm:$0x1] %v250
        %s252 = sand.u32 %s82, 1
        %s253 = scalar_lea.sflag [#allocation4], %s252
        %s254 = sand.u32 %s82, 1
        %s255 = scalar_lea.vmem [#allocation7], %s254
        // Predicated region
        $region37: #{tpu_custom_call.1} parent=27 // pred_check
          %p256 = pneg %p92
        $region38: #{tpu_custom_call.1} parent=27 // pred_check_branch
          %258 = sbr.rel (%p256) target = $region40
        $region39: #{tpu_custom_call.1} parent=27 // pred_region
          %260 = vsyncadd %s253, 0
          %s261 = scalar_lea.hbm %s2, %s22
          %s263 = sshll.u32 %s255, 4
          %s264 = int_to_ptr.vmem [resolvable:$true] %s263
          %s265 = sshll.u32 %s261, 4
          %s266 = int_to_ptr.hbm [resolvable:$true] %s265
          %268 = dma.vmem_to_hbm [thread:$0]  %s264, 16, %s266, %s253
        $region40: #{tpu_custom_call.1} parent=27 // pred_fallthru
          _
      $region28: #{tpu_custom_call.1} parent=5 // pred_fallthru
        _
      %p269 = scmp.le.s32.totalorder 2, %s17
      // Predicated region
      $region41: #{tpu_custom_call.1} parent=5 // pred_check
        %p270 = pneg %p269
      $region42: #{tpu_custom_call.1} parent=5 // pred_check_branch
        %272 = sbr.rel (%p270) target = $region44
      $region43: #{tpu_custom_call.1} parent=5 // pred_region
        %s273 = ssub.s32 %s17, 2
        // Predicated region
        $region45: #{tpu_custom_call.1} parent=43 // pred_check
          %p274 = pneg %p98
        $region46: #{tpu_custom_call.1} parent=43 // pred_check_branch
          %276 = sbr.rel (%p274) target = $region48
        $region47: #{tpu_custom_call.1} parent=43 // pred_region
          %s277 = sand.u32 %s83, 1
          %s278 = scalar_lea.sflag [#allocation4], %s277
          %s279 = sand.u32 %s83, 1
          %s280 = scalar_lea.vmem [#allocation7], %s279
          %282 = dma.done %s278, 16
        $region48: #{tpu_custom_call.1} parent=43 // pred_fallthru
          _
      $region44: #{tpu_custom_call.1} parent=5 // pred_fallthru
        _
    $region6: #{tpu_custom_call.1} parent=1 // loop_footer
      %s21 = sadd.s32 1, %s17
    $region7: #{tpu_custom_call.1} parent=1 // loop_footer_branch
      %16 = sbr.rel target = $region3
    $region8: #{tpu_custom_call.1} parent=1 // loop_exit
      _
    %283 = vsyncpa [#allocation3], 1
    %s284 = scalar_lea.sflag [#allocation3], 1
    %285 = vsyncpa %s284, 1
    %286 = vsyncpa [#allocation6], 1
    %s287 = scalar_lea.sflag [#allocation6], 1
    %288 = vsyncpa %s287, 1
    %289 = vsyncpa [#allocation4], 1
    %s290 = scalar_lea.sflag [#allocation4], 1
    %291 = vsyncpa %s290, 1

</llo_original>
